<compile_context>
chip_gen: v7x
topology: tpu7x:2x2x1
jax: 0.10.0
libtpu: 0.0.40
codegen_flags: <defaults>
</compile_context>

<pallas_src>
import jax
import jax.numpy as jnp
from jax.experimental import pallas as pl
from jax.experimental.pallas import tpu as pltpu  # noqa: F401  (TPU backend import)

# ----- model dims (small but TPU-lane-friendly) -----
ANNOT_DIM = 128      # encoder annotation feature dim
MEMORY_DIM = 32      # decoder memory feature dim
RNN_DIM = 128        # GRUCell hidden dim
ATTN_DIM = 128       # out_dim == attention projection dim
KSIZE = 31           # location conv kernel size
FILTERS = 32         # location conv filters
LK = 64              # 2*KSIZE = 62, zero-padded to 64 for an aligned im2col K


# ------------------------------------------------------------------ kernel

def attention_rnn_cell_kernel(
        x_ref, h_ref, annots_ref, loc_ref, mask_ref,
        w_ih_ref, b_ih_ref, w_hh_ref, b_hh_ref,
        w_q_ref, b_q_ref, w_ann_ref, b_ann_ref,
        w_loc_ref, b_loc_ref, v_ref,
        rnn_out_ref, ctx_out_ref, align_ref):
    """One fused AttentionRNNCell step (GRUCell + location-sensitive attention)."""
    B, T, AD = annots_ref.shape
    H = h_ref.shape[1]
    A = w_q_ref.shape[1]
    bf16 = jnp.bfloat16

    # ---------------- GRUCell (PyTorch semantics, gate order [r, z, n]) ----------
    h0 = h_ref[...]                                                     # (B, H) f32
    gi = jnp.dot(x_ref[...], w_ih_ref[...],
                 preferred_element_type=jnp.float32) + b_ih_ref[...]    # (B, 3H)
    gh = jnp.dot(h0.astype(bf16), w_hh_ref[...],
                 preferred_element_type=jnp.float32) + b_hh_ref[...]    # (B, 3H)
    r = jax.nn.sigmoid(gi[:, 0:H] + gh[:, 0:H])
    z = jax.nn.sigmoid(gi[:, H:2 * H] + gh[:, H:2 * H])
    n = jnp.tanh(gi[:, 2 * H:3 * H] + r * gh[:, 2 * H:3 * H])
    h_new = (1.0 - z) * n + z * h0                                      # (B, H) f32
    rnn_out_ref[...] = h_new

    # ---------------- LocationSensitiveAttention ---------------------------------
    # processed_query: (B, A)
    pq = jnp.dot(h_new.astype(bf16), w_q_ref[...],
                 preferred_element_type=jnp.float32) + b_q_ref[...]

    # processed_annots: single (B*T, AD) @ (AD, A) matmul (batch & time collapsed)
    ann = annots_ref[...]                                               # (B, T, AD) bf16
    pa = jnp.dot(ann.reshape(B * T, AD), w_ann_ref[...],
                 preferred_element_type=jnp.float32) + b_ann_ref[...]   # (B*T, A)

    # processed_loc: im2col'd location features @ folded (conv ∘ loc_linear) weight
    lk = loc_ref.shape[2]
    ploc = jnp.dot(loc_ref[...].reshape(B * T, lk), w_loc_ref[...],
                   preferred_element_type=jnp.float32) + b_loc_ref[...]  # (B*T, A)

    # alignment energies: e[b, t] = v . tanh(pq + pa + ploc)   (VPU + lane reduce)
    s = jnp.tanh(pa.reshape(B, T, A) + ploc.reshape(B, T, A) + pq[:, None, :])
    e = jnp.sum(s * v_ref[...], axis=-1)                                # (B, T) f32

    # masked_fill_(1 - mask, -inf) then sigmoid  ==  sigmoid(e) * {0,1} mask
    sig = jax.nn.sigmoid(e) * mask_ref[...]
    align = sig / jnp.sum(sig, axis=-1, keepdims=True)                  # (B, T)
    align_ref[...] = align

    # context = bmm(align, annots): f32 weighted sum over time
    ctx_out_ref[...] = jnp.sum(align[:, :, None] * ann.astype(jnp.float32), axis=1)


# ------------------------------------------------------------------ wrapper

def attention_rnn_cell_forward(memory, context, rnn_state, annots, atten, mask, params):
    """memory (B, Dm) or (B,1,Dm); context (B, Da); rnn_state (B, H);
       annots (B, T, Da); atten (B, 2, T); mask (B, T) or None."""
    B, T, AD = annots.shape
    bf16 = jnp.bfloat16

    if memory.ndim == 3:
        memory = memory[:, 0, :]

    # GRU input: concat(memory, context) once in the wrapper (layout plumbing only).
    x = jnp.concatenate([memory, context], axis=-1).astype(bf16)        # (B, Dm + Da)

    # Location conv as an im2col matmul, folded with loc_linear (conv has no bias,
    # both are linear) into one (2*K, attn_dim) weight.
    pad = (KSIZE - 1) // 2
    loc_pad = jnp.pad(atten, ((0, 0), (0, 0), (pad, pad)))              # (B, 2, T + 2*pad)
    gather_idx = jnp.arange(T)[:, None] + jnp.arange(KSIZE)[None, :]    # (T, K)
    cols = loc_pad[:, :, gather_idx]                                    # (B, 2, T, K)
    cols = jnp.transpose(cols, (0, 2, 1, 3)).reshape(B, T, 2 * KSIZE)   # idx = c*K + j
    cols = jnp.pad(cols, ((0, 0), (0, 0), (0, LK - 2 * KSIZE))).astype(bf16)

    w_conv2d = jnp.transpose(params["conv_w"], (1, 2, 0)).reshape(2 * KSIZE, FILTERS)
    w_loc_fold = w_conv2d @ params["loc_lin_w"].T                       # (2K, A)
    w_loc_fold = jnp.pad(w_loc_fold, ((0, LK - 2 * KSIZE), (0, 0))).astype(bf16)

    if mask is None:
        mask_f = jnp.ones((B, T), jnp.float32)
    else:
        mask_f = mask.reshape(B, T).astype(jnp.float32)

    out_shapes = (
        jax.ShapeDtypeStruct((B, RNN_DIM), jnp.float32),   # rnn_output
        jax.ShapeDtypeStruct((B, AD), jnp.float32),        # context
        jax.ShapeDtypeStruct((B, T), jnp.float32),         # alignment
    )
    # Single fused call: whole-array VMEM blocks (tiny working set), no HBM round trips.
    return pl.pallas_call(
        attention_rnn_cell_kernel,
        out_shape=out_shapes,
    )(x, rnn_state.astype(jnp.float32), annots.astype(bf16), cols, mask_f,
      params["gru_w_ih"].astype(bf16), params["gru_b_ih"],
      params["gru_w_hh"].astype(bf16), params["gru_b_hh"],
      params["query_w"].astype(bf16), params["query_b"],
      params["annot_w"].astype(bf16), params["annot_b"],
      w_loc_fold, params["loc_lin_b"],
      params["v_w"])


# ------------------------------------------------------------------ params

def init_params(key):
    keys = iter(jax.random.split(key, 32))

    def nrm(shape, s=0.08):
        return s * jax.random.normal(next(keys), shape, jnp.float32)

    p = {}
    in_dim = MEMORY_DIM + ANNOT_DIM
    # GRUCell: weights stored (in, 3H) with gate order [r, z, n]
    p["gru_w_ih"] = nrm((in_dim, 3 * RNN_DIM))
    p["gru_w_hh"] = nrm((RNN_DIM, 3 * RNN_DIM))
    p["gru_b_ih"] = nrm((1, 3 * RNN_DIM))
    p["gru_b_hh"] = nrm((1, 3 * RNN_DIM))
    # LocationSensitiveAttention
    p["conv_w"] = nrm((FILTERS, 2, KSIZE))         # Conv1d(2, filters, k=31, bias=False)
    p["loc_lin_w"] = nrm((ATTN_DIM, FILTERS))      # Linear(filters, attn_dim)  (torch layout)
    p["loc_lin_b"] = nrm((1, ATTN_DIM))
    p["query_w"] = nrm((RNN_DIM, ATTN_DIM))        # Linear(query_dim, attn_dim), stored (in, out)
    p["query_b"] = nrm((1, ATTN_DIM))
    p["annot_w"] = nrm((ANNOT_DIM, ATTN_DIM))      # Linear(annot_dim, attn_dim), stored (in, out)
    p["annot_b"] = nrm((1, ATTN_DIM))
    p["v_w"] = nrm((1, ATTN_DIM))                  # Linear(attn_dim, 1, bias=False)
    return p


# ------------------------------------------------------------------ demo

if __name__ == "__main__":
    B, T = 2, 16
    key = jax.random.PRNGKey(0)
    k1, k2, k3, k4, k5, kp = jax.random.split(key, 6)

    memory = jax.random.normal(k1, (B, MEMORY_DIM), jnp.float32)
    context = jax.random.normal(k2, (B, ANNOT_DIM), jnp.float32)
    rnn_state = jax.random.normal(k3, (B, RNN_DIM), jnp.float32)
    annots = jax.random.normal(k4, (B, T, ANNOT_DIM), jnp.float32)
    atten = jax.random.normal(k5, (B, 2, T), jnp.float32)
    mask = jnp.ones((B, T), jnp.float32)
    params = init_params(kp)

    fwd = jax.jit(attention_rnn_cell_forward)
    rnn_out, ctx, align = fwd(memory, context, rnn_state, annots, atten, mask, params)
    (rnn_out, ctx, align) = jax.block_until_ready((rnn_out, ctx, align))

    assert rnn_out.shape == (B, RNN_DIM), rnn_out.shape
    assert ctx.shape == (B, ANNOT_DIM), ctx.shape
    assert align.shape == (B, T), align.shape
    assert bool(jnp.isfinite(rnn_out).all())
    assert bool(jnp.isfinite(ctx).all())
    assert bool(jnp.isfinite(align).all())
    # sigmoid-normalized attention rows sum to 1
    assert bool(jnp.allclose(jnp.sum(align, axis=-1), 1.0, atol=1e-3))
    print("KERNEL_OK")
</pallas_src>

<mosaic_0001>
module attributes {stable_mosaic.version = 11 : i64} {
  func.func @attention_rnn_cell_kernel(%arg0: memref<2x160xbf16, #tpu.memory_space<vmem>>, %arg1: memref<2x128xf32, #tpu.memory_space<vmem>>, %arg2: memref<2x16x128xbf16, #tpu.memory_space<vmem>>, %arg3: memref<2x16x64xbf16, #tpu.memory_space<vmem>>, %arg4: memref<2x16xf32, #tpu.memory_space<vmem>>, %arg5: memref<160x384xbf16, #tpu.memory_space<vmem>>, %arg6: memref<1x384xf32, #tpu.memory_space<vmem>>, %arg7: memref<128x384xbf16, #tpu.memory_space<vmem>>, %arg8: memref<1x384xf32, #tpu.memory_space<vmem>>, %arg9: memref<128x128xbf16, #tpu.memory_space<vmem>>, %arg10: memref<1x128xf32, #tpu.memory_space<vmem>>, %arg11: memref<128x128xbf16, #tpu.memory_space<vmem>>, %arg12: memref<1x128xf32, #tpu.memory_space<vmem>>, %arg13: memref<64x128xbf16, #tpu.memory_space<vmem>>, %arg14: memref<1x128xf32, #tpu.memory_space<vmem>>, %arg15: memref<1x128xf32, #tpu.memory_space<vmem>>, %arg16: memref<2x128xf32, #tpu.memory_space<vmem>>, %arg17: memref<2x128xf32, #tpu.memory_space<vmem>>, %arg18: memref<2x16xf32, #tpu.memory_space<vmem>>) attributes {dimension_semantics = [], scalar_prefetch = 0 : i64, scratch_operands = 0 : i64, tpu.core_type = #tpu.core_type<tc>} {
    %c0 = arith.constant 0 : index
    %c0_0 = arith.constant 0 : index
    %0 = vector.load %arg1[%c0, %c0_0] : memref<2x128xf32, #tpu.memory_space<vmem>>, vector<2x128xf32>
    %c0_1 = arith.constant 0 : index
    %c0_2 = arith.constant 0 : index
    %1 = vector.load %arg0[%c0_1, %c0_2] : memref<2x160xbf16, #tpu.memory_space<vmem>>, vector<2x160xbf16>
    %c0_3 = arith.constant 0 : index
    %c0_4 = arith.constant 0 : index
    %2 = vector.load %arg5[%c0_3, %c0_4] : memref<160x384xbf16, #tpu.memory_space<vmem>>, vector<160x384xbf16>
    %cst = arith.constant dense<0.000000e+00> : vector<2x384xf32>
    %3 = tpu.matmul %1, %2, %cst {dimension_numbers = #tpu.dot_dimension_numbers<[1], [0], [0], [1], [0, 0, 1, 1], [], []>} : vector<2x160xbf16>, vector<160x384xbf16>, vector<2x384xf32> -> vector<2x384xf32>
    %c0_5 = arith.constant 0 : index
    %c0_6 = arith.constant 0 : index
    %4 = vector.load %arg6[%c0_5, %c0_6] : memref<1x384xf32, #tpu.memory_space<vmem>>, vector<1x384xf32>
    %5 = vector.broadcast %4 : vector<1x384xf32> to vector<2x384xf32>
    %6 = arith.addf %3, %5 : vector<2x384xf32>
    %7 = arith.truncf %0 : vector<2x128xf32> to vector<2x128xbf16>
    %c0_7 = arith.constant 0 : index
    %c0_8 = arith.constant 0 : index
    %8 = vector.load %arg7[%c0_7, %c0_8] : memref<128x384xbf16, #tpu.memory_space<vmem>>, vector<128x384xbf16>
    %cst_9 = arith.constant dense<0.000000e+00> : vector<2x384xf32>
    %9 = tpu.matmul %7, %8, %cst_9 {dimension_numbers = #tpu.dot_dimension_numbers<[1], [0], [0], [1], [0, 0, 1, 1], [], []>} : vector<2x128xbf16>, vector<128x384xbf16>, vector<2x384xf32> -> vector<2x384xf32>
    %c0_10 = arith.constant 0 : index
    %c0_11 = arith.constant 0 : index
    %10 = vector.load %arg8[%c0_10, %c0_11] : memref<1x384xf32, #tpu.memory_space<vmem>>, vector<1x384xf32>
    %11 = vector.broadcast %10 : vector<1x384xf32> to vector<2x384xf32>
    %12 = arith.addf %9, %11 : vector<2x384xf32>
    %13 = vector.extract_strided_slice %6 {offsets = [0, 0], sizes = [2, 128], strides = [1, 1]} : vector<2x384xf32> to vector<2x128xf32>
    %14 = vector.extract_strided_slice %12 {offsets = [0, 0], sizes = [2, 128], strides = [1, 1]} : vector<2x384xf32> to vector<2x128xf32>
    %15 = arith.addf %13, %14 : vector<2x128xf32>
    %16 = arith.negf %15 : vector<2x128xf32>
    %17 = math.exp %16 : vector<2x128xf32>
    %cst_12 = arith.constant 1.000000e+00 : f32
    %18 = vector.broadcast %cst_12 : f32 to vector<2x128xf32>
    %19 = arith.addf %18, %17 : vector<2x128xf32>
    %20 = arith.divf %18, %19 : vector<2x128xf32>
    %21 = vector.extract_strided_slice %6 {offsets = [0, 128], sizes = [2, 128], strides = [1, 1]} : vector<2x384xf32> to vector<2x128xf32>
    %22 = vector.extract_strided_slice %12 {offsets = [0, 128], sizes = [2, 128], strides = [1, 1]} : vector<2x384xf32> to vector<2x128xf32>
    %23 = arith.addf %21, %22 : vector<2x128xf32>
    %24 = arith.negf %23 : vector<2x128xf32>
    %25 = math.exp %24 : vector<2x128xf32>
    %cst_13 = arith.constant 1.000000e+00 : f32
    %26 = vector.broadcast %cst_13 : f32 to vector<2x128xf32>
    %27 = arith.addf %26, %25 : vector<2x128xf32>
    %28 = arith.divf %26, %27 : vector<2x128xf32>
    %29 = vector.extract_strided_slice %6 {offsets = [0, 256], sizes = [2, 128], strides = [1, 1]} : vector<2x384xf32> to vector<2x128xf32>
    %30 = vector.extract_strided_slice %12 {offsets = [0, 256], sizes = [2, 128], strides = [1, 1]} : vector<2x384xf32> to vector<2x128xf32>
    %31 = arith.mulf %20, %30 : vector<2x128xf32>
    %32 = arith.addf %29, %31 : vector<2x128xf32>
    %33 = math.tanh %32 : vector<2x128xf32>
    %cst_14 = arith.constant 1.000000e+00 : f32
    %34 = vector.broadcast %cst_14 : f32 to vector<2x128xf32>
    %35 = arith.subf %34, %28 : vector<2x128xf32>
    %36 = arith.mulf %35, %33 : vector<2x128xf32>
    %37 = arith.mulf %28, %0 : vector<2x128xf32>
    %38 = arith.addf %36, %37 : vector<2x128xf32>
    %c0_15 = arith.constant 0 : index
    %c0_16 = arith.constant 0 : index
    %39 = vector.load %arg16[%c0_15, %c0_16] : memref<2x128xf32, #tpu.memory_space<vmem>>, vector<2x128xf32>
    tpu.vector_store %arg16[%c0_15, %c0_16], %38 {strides = array<i32>} : memref<2x128xf32, #tpu.memory_space<vmem>>, vector<2x128xf32>,
    %40 = arith.truncf %38 : vector<2x128xf32> to vector<2x128xbf16>
    %c0_17 = arith.constant 0 : index
    %c0_18 = arith.constant 0 : index
    %41 = vector.load %arg9[%c0_17, %c0_18] : memref<128x128xbf16, #tpu.memory_space<vmem>>, vector<128x128xbf16>
    %cst_19 = arith.constant dense<0.000000e+00> : vector<2x128xf32>
    %42 = tpu.matmul %40, %41, %cst_19 {dimension_numbers = #tpu.dot_dimension_numbers<[1], [0], [0], [1], [0, 0, 1, 1], [], []>} : vector<2x128xbf16>, vector<128x128xbf16>, vector<2x128xf32> -> vector<2x128xf32>
    %c0_20 = arith.constant 0 : index
    %c0_21 = arith.constant 0 : index
    %43 = vector.load %arg10[%c0_20, %c0_21] : memref<1x128xf32, #tpu.memory_space<vmem>>, vector<1x128xf32>
    %44 = vector.broadcast %43 : vector<1x128xf32> to vector<2x128xf32>
    %45 = arith.addf %42, %44 : vector<2x128xf32>
    %c0_22 = arith.constant 0 : index
    %c0_23 = arith.constant 0 : index
    %c0_24 = arith.constant 0 : index
    %46 = vector.load %arg2[%c0_22, %c0_23, %c0_24] : memref<2x16x128xbf16, #tpu.memory_space<vmem>>, vector<2x16x128xbf16>
    %47 = vector.shape_cast %46 : vector<2x16x128xbf16> to vector<32x128xbf16>
    %c0_25 = arith.constant 0 : index
    %c0_26 = arith.constant 0 : index
    %48 = vector.load %arg11[%c0_25, %c0_26] : memref<128x128xbf16, #tpu.memory_space<vmem>>, vector<128x128xbf16>
    %cst_27 = arith.constant dense<0.000000e+00> : vector<32x128xf32>
    %49 = tpu.matmul %47, %48, %cst_27 {dimension_numbers = #tpu.dot_dimension_numbers<[1], [0], [0], [1], [0, 0, 1, 1], [], []>} : vector<32x128xbf16>, vector<128x128xbf16>, vector<32x128xf32> -> vector<32x128xf32>
    %c0_28 = arith.constant 0 : index
    %c0_29 = arith.constant 0 : index
    %50 = vector.load %arg12[%c0_28, %c0_29] : memref<1x128xf32, #tpu.memory_space<vmem>>, vector<1x128xf32>
    %51 = vector.broadcast %50 : vector<1x128xf32> to vector<32x128xf32>
    %52 = arith.addf %49, %51 : vector<32x128xf32>
    %c0_30 = arith.constant 0 : index
    %c0_31 = arith.constant 0 : index
    %c0_32 = arith.constant 0 : index
    %53 = vector.load %arg3[%c0_30, %c0_31, %c0_32] : memref<2x16x64xbf16, #tpu.memory_space<vmem>>, vector<2x16x64xbf16>
    %54 = vector.shape_cast %53 : vector<2x16x64xbf16> to vector<32x64xbf16>
    %c0_33 = arith.constant 0 : index
    %c0_34 = arith.constant 0 : index
    %55 = vector.load %arg13[%c0_33, %c0_34] : memref<64x128xbf16, #tpu.memory_space<vmem>>, vector<64x128xbf16>
    %cst_35 = arith.constant dense<0.000000e+00> : vector<32x128xf32>
    %56 = tpu.matmul %54, %55, %cst_35 {dimension_numbers = #tpu.dot_dimension_numbers<[1], [0], [0], [1], [0, 0, 1, 1], [], []>} : vector<32x64xbf16>, vector<64x128xbf16>, vector<32x128xf32> -> vector<32x128xf32>
    %c0_36 = arith.constant 0 : index
    %c0_37 = arith.constant 0 : index
    %57 = vector.load %arg14[%c0_36, %c0_37] : memref<1x128xf32, #tpu.memory_space<vmem>>, vector<1x128xf32>
    %58 = vector.broadcast %57 : vector<1x128xf32> to vector<32x128xf32>
    %59 = arith.addf %56, %58 : vector<32x128xf32>
    %60 = vector.shape_cast %52 : vector<32x128xf32> to vector<2x16x128xf32>
    %61 = vector.shape_cast %59 : vector<32x128xf32> to vector<2x16x128xf32>
    %62 = arith.addf %60, %61 : vector<2x16x128xf32>
    %63 = vector.shape_cast %45 : vector<2x128xf32> to vector<2x1x128xf32>
    %64 = vector.broadcast %63 : vector<2x1x128xf32> to vector<2x16x128xf32>
    %65 = arith.addf %62, %64 : vector<2x16x128xf32>
    %66 = math.tanh %65 : vector<2x16x128xf32>
    %c0_38 = arith.constant 0 : index
    %c0_39 = arith.constant 0 : index
    %67 = vector.load %arg15[%c0_38, %c0_39] : memref<1x128xf32, #tpu.memory_space<vmem>>, vector<1x128xf32>
    %68 = vector.shape_cast %67 : vector<1x128xf32> to vector<1x1x128xf32>
    %69 = vector.broadcast %68 : vector<1x1x128xf32> to vector<2x16x128xf32>
    %70 = arith.mulf %66, %69 : vector<2x16x128xf32>
    %cst_40 = arith.constant dense<0.000000e+00> : vector<2x16xf32>
    %71 = vector.multi_reduction <add>, %70, %cst_40 [2] : vector<2x16x128xf32> to vector<2x16xf32>
    %72 = arith.negf %71 : vector<2x16xf32>
    %73 = math.exp %72 : vector<2x16xf32>
    %cst_41 = arith.constant 1.000000e+00 : f32
    %74 = vector.broadcast %cst_41 : f32 to vector<2x16xf32>
    %75 = arith.addf %74, %73 : vector<2x16xf32>
    %76 = arith.divf %74, %75 : vector<2x16xf32>
    %c0_42 = arith.constant 0 : index
    %c0_43 = arith.constant 0 : index
    %77 = vector.load %arg4[%c0_42, %c0_43] : memref<2x16xf32, #tpu.memory_space<vmem>>, vector<2x16xf32>
    %78 = arith.mulf %76, %77 : vector<2x16xf32>
    %cst_44 = arith.constant dense<0.000000e+00> : vector<2xf32>
    %79 = vector.multi_reduction <add>, %78, %cst_44 [1] : vector<2x16xf32> to vector<2xf32>
    %80 = vector.shape_cast %79 : vector<2xf32> to vector<2x1xf32>
    %81 = vector.broadcast %80 : vector<2x1xf32> to vector<2x16xf32>
    %82 = arith.divf %78, %81 : vector<2x16xf32>
    %c0_45 = arith.constant 0 : index
    %c0_46 = arith.constant 0 : index
    %83 = vector.load %arg18[%c0_45, %c0_46] : memref<2x16xf32, #tpu.memory_space<vmem>>, vector<2x16xf32>
    tpu.vector_store %arg18[%c0_45, %c0_46], %82 {strides = array<i32>} : memref<2x16xf32, #tpu.memory_space<vmem>>, vector<2x16xf32>,
    %84 = vector.shape_cast %82 : vector<2x16xf32> to vector<2x16x1xf32>
    %85 = arith.extf %46 : vector<2x16x128xbf16> to vector<2x16x128xf32>
    %86 = vector.broadcast %84 : vector<2x16x1xf32> to vector<2x16x128xf32>
    %87 = arith.mulf %86, %85 : vector<2x16x128xf32>
    %cst_47 = arith.constant dense<0.000000e+00> : vector<2x128xf32>
    %88 = vector.multi_reduction <add>, %87, %cst_47 [1] : vector<2x16x128xf32> to vector<2x128xf32>
    %c0_48 = arith.constant 0 : index
    %c0_49 = arith.constant 0 : index
    %89 = vector.load %arg17[%c0_48, %c0_49] : memref<2x128xf32, #tpu.memory_space<vmem>>, vector<2x128xf32>
    tpu.vector_store %arg17[%c0_48, %c0_49], %88 {strides = array<i32>} : memref<2x128xf32, #tpu.memory_space<vmem>>, vector<2x128xf32>,
    return
  }
}

</mosaic_0001>

<llo_original>
// kernel: attention_rnn_cell_forward.1
$region0: #{attention_rnn_cell_forward.1}
  #allocation0 [shape = 'u32[]', space=smem, size = 0x4, offset = 0x4, fixed_abs, tag = 'smem constant byte address 0x4 - core index']
  #allocation1 [shape = 'u32[144,128]{1,0:T(1,128)}', space=vmem, size = 0x12000, scoped, tag = 'internal scratch']
  %s0 = inlined_call_operand.vmem [shape: bf16[2,160], index: 0, kind: input, shape index: {}]
  %s1 = inlined_call_operand.vmem [shape: f32[2,128], index: 1, kind: input, shape index: {}]
  %s2 = inlined_call_operand.vmem [shape: bf16[2,16,128], index: 2, kind: input, shape index: {}]
  %s3 = inlined_call_operand.vmem [shape: bf16[2,16,64], index: 3, kind: input, shape index: {}]
  %s4 = inlined_call_operand.vmem [shape: f32[2,16], index: 4, kind: input, shape index: {}]
  %s5 = inlined_call_operand.vmem [shape: bf16[160,384], index: 5, kind: input, shape index: {}]
  %s6 = inlined_call_operand.vmem [shape: f32[1,384], index: 6, kind: input, shape index: {}]
  %s7 = inlined_call_operand.vmem [shape: bf16[128,384], index: 7, kind: input, shape index: {}]
  %s8 = inlined_call_operand.vmem [shape: f32[1,384], index: 8, kind: input, shape index: {}]
  %s9 = inlined_call_operand.vmem [shape: bf16[128,128], index: 9, kind: input, shape index: {}]
  %s10 = inlined_call_operand.vmem [shape: f32[1,128], index: 10, kind: input, shape index: {}]
  %s11 = inlined_call_operand.vmem [shape: bf16[128,128], index: 11, kind: input, shape index: {}]
  %s12 = inlined_call_operand.vmem [shape: f32[1,128], index: 12, kind: input, shape index: {}]
  %s13 = inlined_call_operand.vmem [shape: bf16[64,128], index: 13, kind: input, shape index: {}]
  %s14 = inlined_call_operand.vmem [shape: f32[1,128], index: 14, kind: input, shape index: {}]
  %s15 = inlined_call_operand.vmem [shape: f32[1,128], index: 15, kind: input, shape index: {}]
  %s16 = inlined_call_operand.hbm [shape: f32[2,128], index: 16, kind: output, shape index: {0}]
  %s17 = inlined_call_operand.hbm [shape: f32[2,128], index: 17, kind: output, shape index: {1}]
  %s18 = inlined_call_operand.hbm [shape: f32[2,16], index: 18, kind: output, shape index: {2}]
  %19 = xla_tuple %s16, %s17, %s18
  %s20 = sld [smem:[#allocation0]]
  $region90: #{attention_rnn_cell_forward.1} parent=0
    _
  %s22 = ssub.s32 1, %s20
  %s23 = scalar_select 0, %s22, %s20
  $region1: #{attention_rnn_cell_forward.1} parent=0
    #allocation2 [shape = 'u8[1024]{0}', space=vmem, size = 0x400, scoped, tag = 'output window, operand 0, single buffered']
    #allocation3 [shape = 's32[1]{0}', space=sflag, size = 0x4, scoped, tag = 'scoped memory for attention_rnn_cell_forward.1']
    #allocation4 [shape = 'u8[1024]{0}', space=vmem, size = 0x400, scoped, tag = 'output window, operand 1, single buffered']
    #allocation5 [shape = 's32[1]{0}', space=sflag, size = 0x4, scoped, tag = 'scoped memory for attention_rnn_cell_forward.1']
    #allocation6 [shape = 'u8[1024]{0}', space=vmem, size = 0x400, scoped, tag = 'output window, operand 2, single buffered']
    %24 = vsyncpa [#allocation3], 0
    %25 = vsyncpa [#allocation5], 0
    // Predicated region
    $region2: #{attention_rnn_cell_forward.1} parent=1 // pred_check
      _
    $region3: #{attention_rnn_cell_forward.1} parent=1 // pred_check_branch
      %27 = sbr.rel (0) target = $region5
    $region4: #{attention_rnn_cell_forward.1} parent=1 // pred_region
      _
    $region5: #{attention_rnn_cell_forward.1} parent=1 // pred_fallthru
      _
    // Predicated region
    $region6: #{attention_rnn_cell_forward.1} parent=1 // pred_check
      _
    $region7: #{attention_rnn_cell_forward.1} parent=1 // pred_check_branch
      %29 = sbr.rel (0) target = $region9
    $region8: #{attention_rnn_cell_forward.1} parent=1 // pred_region
      _
    $region9: #{attention_rnn_cell_forward.1} parent=1 // pred_fallthru
      _
    // Predicated region
    $region10: #{attention_rnn_cell_forward.1} parent=1 // pred_check
      _
    $region11: #{attention_rnn_cell_forward.1} parent=1 // pred_check_branch
      %31 = sbr.rel (0) target = $region13
    $region12: #{attention_rnn_cell_forward.1} parent=1 // pred_region
      _
    $region13: #{attention_rnn_cell_forward.1} parent=1 // pred_fallthru
      _
    // Predicated region
    $region14: #{attention_rnn_cell_forward.1} parent=1 // pred_check
      _
    $region15: #{attention_rnn_cell_forward.1} parent=1 // pred_check_branch
      %33 = sbr.rel (0) target = $region17
    $region16: #{attention_rnn_cell_forward.1} parent=1 // pred_region
      _
    $region17: #{attention_rnn_cell_forward.1} parent=1 // pred_fallthru
      _
    // Predicated region
    $region18: #{attention_rnn_cell_forward.1} parent=1 // pred_check
      _
    $region19: #{attention_rnn_cell_forward.1} parent=1 // pred_check_branch
      %35 = sbr.rel (0) target = $region21
    $region20: #{attention_rnn_cell_forward.1} parent=1 // pred_region
      _
    $region21: #{attention_rnn_cell_forward.1} parent=1 // pred_fallthru
      _
    // Predicated region
    $region22: #{attention_rnn_cell_forward.1} parent=1 // pred_check
      _
    $region23: #{attention_rnn_cell_forward.1} parent=1 // pred_check_branch
      %37 = sbr.rel (0) target = $region25
    $region24: #{attention_rnn_cell_forward.1} parent=1 // pred_region
      _
    $region25: #{attention_rnn_cell_forward.1} parent=1 // pred_fallthru
      _
    // Predicated region
    $region26: #{attention_rnn_cell_forward.1} parent=1 // pred_check
      _
    $region27: #{attention_rnn_cell_forward.1} parent=1 // pred_check_branch
      %39 = sbr.rel (0) target = $region29
    $region28: #{attention_rnn_cell_forward.1} parent=1 // pred_region
      _
    $region29: #{attention_rnn_cell_forward.1} parent=1 // pred_fallthru
      _
    // Predicated region
    $region30: #{attention_rnn_cell_forward.1} parent=1 // pred_check
      _
    $region31: #{attention_rnn_cell_forward.1} parent=1 // pred_check_branch
      %41 = sbr.rel (0) target = $region33
    $region32: #{attention_rnn_cell_forward.1} parent=1 // pred_region
      _
    $region33: #{attention_rnn_cell_forward.1} parent=1 // pred_fallthru
      _
    // Predicated region
    $region34: #{attention_rnn_cell_forward.1} parent=1 // pred_check
      _
    $region35: #{attention_rnn_cell_forward.1} parent=1 // pred_check_branch
      %43 = sbr.rel (0) target = $region37
    $region36: #{attention_rnn_cell_forward.1} parent=1 // pred_region
      _
    $region37: #{attention_rnn_cell_forward.1} parent=1 // pred_fallthru
      _
    // Predicated region
    $region38: #{attention_rnn_cell_forward.1} parent=1 // pred_check
      _
    $region39: #{attention_rnn_cell_forward.1} parent=1 // pred_check_branch
      %45 = sbr.rel (0) target = $region41
    $region40: #{attention_rnn_cell_forward.1} parent=1 // pred_region
      _
    $region41: #{attention_rnn_cell_forward.1} parent=1 // pred_fallthru
      _
    // Predicated region
    $region42: #{attention_rnn_cell_forward.1} parent=1 // pred_check
      _
    $region43: #{attention_rnn_cell_forward.1} parent=1 // pred_check_branch
      %47 = sbr.rel (0) target = $region45
    $region44: #{attention_rnn_cell_forward.1} parent=1 // pred_region
      _
    $region45: #{attention_rnn_cell_forward.1} parent=1 // pred_fallthru
      _
    // Predicated region
    $region46: #{attention_rnn_cell_forward.1} parent=1 // pred_check
      _
    $region47: #{attention_rnn_cell_forward.1} parent=1 // pred_check_branch
      %49 = sbr.rel (0) target = $region49
    $region48: #{attention_rnn_cell_forward.1} parent=1 // pred_region
      _
    $region49: #{attention_rnn_cell_forward.1} parent=1 // pred_fallthru
      _
    // Predicated region
    $region50: #{attention_rnn_cell_forward.1} parent=1 // pred_check
      _
    $region51: #{attention_rnn_cell_forward.1} parent=1 // pred_check_branch
      %51 = sbr.rel (0) target = $region53
    $region52: #{attention_rnn_cell_forward.1} parent=1 // pred_region
      _
    $region53: #{attention_rnn_cell_forward.1} parent=1 // pred_fallthru
      _
    // Predicated region
    $region54: #{attention_rnn_cell_forward.1} parent=1 // pred_check
      _
    $region55: #{attention_rnn_cell_forward.1} parent=1 // pred_check_branch
      %53 = sbr.rel (0) target = $region57
    $region56: #{attention_rnn_cell_forward.1} parent=1 // pred_region
      _
    $region57: #{attention_rnn_cell_forward.1} parent=1 // pred_fallthru
      _
    // Predicated region
    $region58: #{attention_rnn_cell_forward.1} parent=1 // pred_check
      _
    $region59: #{attention_rnn_cell_forward.1} parent=1 // pred_check_branch
      %55 = sbr.rel (0) target = $region61
    $region60: #{attention_rnn_cell_forward.1} parent=1 // pred_region
      _
    $region61: #{attention_rnn_cell_forward.1} parent=1 // pred_fallthru
      _
    // Predicated region
    $region62: #{attention_rnn_cell_forward.1} parent=1 // pred_check
      _
    $region63: #{attention_rnn_cell_forward.1} parent=1 // pred_check_branch
      %57 = sbr.rel (0) target = $region65
    $region64: #{attention_rnn_cell_forward.1} parent=1 // pred_region
      _
    $region65: #{attention_rnn_cell_forward.1} parent=1 // pred_fallthru
      _
    %v59 = vld [vmem:[%s1] sm:$0x3]
    %v60 = vld [vmem:[%s0] sm:$0x3]
    %v61 = vld [vmem:[%s5] sm:$0xff]
    %v62 = vld [vmem:[%s5 + $0x8] sm:$0xf]
    %v63 = vld [vmem:[%s5 + $0xc] sm:$0xff]
    %v64 = vld [vmem:[%s5 + $0x14] sm:$0xf]
    %v65 = vld [vmem:[%s5 + $0x18] sm:$0xff]
    %v66 = vld [vmem:[%s5 + $0x20] sm:$0xf]
    %v67 = vld [vmem:[%s5 + $0x24] sm:$0xff]
    %v68 = vld [vmem:[%s5 + $0x2c] sm:$0xf]
    %v69 = vld [vmem:[%s5 + $0x30] sm:$0xff]
    %v70 = vld [vmem:[%s5 + $0x38] sm:$0xf]
    %v71 = vld [vmem:[%s5 + $0x3c] sm:$0xff]
    %v72 = vld [vmem:[%s5 + $0x44] sm:$0xf]
    %v73 = vld [vmem:[%s5 + $0x48] sm:$0xff]
    %v74 = vld [vmem:[%s5 + $0x50] sm:$0xf]
    %v75 = vld [vmem:[%s5 + $0x54] sm:$0xff]
    %v76 = vld [vmem:[%s5 + $0x5c] sm:$0xf]
    %v77 = vld [vmem:[%s5 + $0x60] sm:$0xff]
    %v78 = vld [vmem:[%s5 + $0x68] sm:$0xf]
    %v79 = vld [vmem:[%s5 + $0x6c] sm:$0xff]
    %v80 = vld [vmem:[%s5 + $0x74] sm:$0xf]
    %v81 = vld [vmem:[%s5 + $0x78] sm:$0xff]
    %v82 = vld [vmem:[%s5 + $0x80] sm:$0xf]
    %v83 = vld [vmem:[%s5 + $0x84] sm:$0xff]
    %v84 = vld [vmem:[%s5 + $0x8c] sm:$0xf]
    %v85 = vld [vmem:[%s5 + $0x90] sm:$0xff]
    %v86 = vld [vmem:[%s5 + $0x98] sm:$0xf]
    %v87 = vld [vmem:[%s5 + $0x9c] sm:$0xff]
    %v88 = vld [vmem:[%s5 + $0xa4] sm:$0xf]
    %v89 = vld [vmem:[%s5 + $0xa8] sm:$0xff]
    %v90 = vld [vmem:[%s5 + $0xb0] sm:$0xf]
    %v91 = vld [vmem:[%s5 + $0xb4] sm:$0xff]
    %v92 = vld [vmem:[%s5 + $0xbc] sm:$0xf]
    %v93 = vld [vmem:[%s5 + $0xc0] sm:$0xff]
    %v94 = vld [vmem:[%s5 + $0xc8] sm:$0xf]
    %v95 = vld [vmem:[%s5 + $0xcc] sm:$0xff]
    %v96 = vld [vmem:[%s5 + $0xd4] sm:$0xf]
    %v97 = vld [vmem:[%s5 + $0xd8] sm:$0xff]
    %v98 = vld [vmem:[%s5 + $0xe0] sm:$0xf]
    %v99 = vld [vmem:[%s5 + $0xe4] sm:$0xff]
    %v100 = vld [vmem:[%s5 + $0xec] sm:$0xf]
    %v101 = vld [vmem:[%s6] sm:$0x7]
    %v103 = vlaneseq
    %v104 = vshrl.u32 %v103, 7
    %v105 = vsub.s32 0, %v104
    %v106 = vrot.slane %v101, %v105
    %v107 = vlaneseq
    %v108 = vshrl.u32 %v107, 7
    %v109 = vsub.s32 1, %v108
    %v110 = vrot.slane %v101, %v109
    %v111 = vlaneseq
    %v112 = vshrl.u32 %v111, 7
    %v113 = vsub.s32 2, %v112
    %v114 = vrot.slane %v101, %v113
    %v120 = vunpack.c.l.s4 1966171168
    %v121 = vunpack.c.0.s8 %v120
    %v122 = vlaneseq
    %v123 = vshrl.u32 %v122, 7
    %v124 = vsub.s32 %v121, %v123
    %v125 = vrot.slane %v60, %v124
    %v126 = vcombine.high %v125, %v125
    %v128 = vunpack.c.l.s4 1966171168
    %v129 = vunpack.c.0.s8 %v128
    %v130 = vlaneseq
    %v131 = vshrl.u32 %v130, 7
    %v132 = vsub.s32 %v129, %v131
    %v133 = vrot.slane %v125, %v132
    %v135 = vunpack.c.l.s4 1966171168
    %v136 = vunpack.c.0.s8 %v135
    %v137 = vlaneseq
    %v138 = vshrl.u32 %v137, 7
    %v139 = vsub.s32 %v136, %v138
    %v140 = vrot.slane %v126, %v139
    %v182 = vunpack.c.l.b16 %v61
    %v183 = vunpack.c.h.b16 %v61
    %v184 = vunpack.c.l.b16 %v62
    %v185 = vunpack.c.l.b16 %v63
    %v186 = vunpack.c.h.b16 %v63
    %v187 = vunpack.c.l.b16 %v64
    %v188 = vunpack.c.l.b16 %v65
    %v189 = vunpack.c.h.b16 %v65
    %v190 = vunpack.c.l.b16 %v66
    %v191 = vunpack.c.l.b16 %v67
    %v192 = vunpack.c.h.b16 %v67
    %v193 = vunpack.c.l.b16 %v68
    %v194 = vunpack.c.l.b16 %v69
    %v195 = vunpack.c.h.b16 %v69
    %v196 = vunpack.c.l.b16 %v70
    %v197 = vunpack.c.l.b16 %v71
    %v198 = vunpack.c.h.b16 %v71
    %v199 = vunpack.c.l.b16 %v72
    %v200 = vunpack.c.l.b16 %v73
    %v201 = vunpack.c.h.b16 %v73
    %v202 = vunpack.c.l.b16 %v74
    %v203 = vunpack.c.l.b16 %v75
    %v204 = vunpack.c.h.b16 %v75
    %v205 = vunpack.c.l.b16 %v76
    %v206 = vunpack.c.l.b16 %v77
    %v207 = vunpack.c.h.b16 %v77
    %v208 = vunpack.c.l.b16 %v78
    %v209 = vunpack.c.l.b16 %v79
    %v210 = vunpack.c.h.b16 %v79
    %v211 = vunpack.c.l.b16 %v80
    %v212 = vunpack.c.l.b16 %v81
    %v213 = vunpack.c.h.b16 %v81
    %v214 = vunpack.c.l.b16 %v82
    %v215 = vunpack.c.l.b16 %v83
    %v216 = vunpack.c.h.b16 %v83
    %v217 = vunpack.c.l.b16 %v84
    %v218 = vunpack.c.l.b16 %v85
    %v219 = vunpack.c.h.b16 %v85
    %v220 = vunpack.c.l.b16 %v86
    %v221 = vunpack.c.l.b16 %v87
    %v222 = vunpack.c.h.b16 %v87
    %v223 = vunpack.c.l.b16 %v88
    %v224 = vunpack.c.l.b16 %v89
    %v225 = vunpack.c.h.b16 %v89
    %v226 = vunpack.c.l.b16 %v90
    %v227 = vunpack.c.l.b16 %v91
    %v228 = vunpack.c.h.b16 %v91
    %v229 = vunpack.c.l.b16 %v92
    %v230 = vunpack.c.l.b16 %v93
    %v231 = vunpack.c.h.b16 %v93
    %v232 = vunpack.c.l.b16 %v94
    %v233 = vunpack.c.l.b16 %v95
    %v234 = vunpack.c.h.b16 %v95
    %v235 = vunpack.c.l.b16 %v96
    %v236 = vunpack.c.l.b16 %v97
    %v237 = vunpack.c.h.b16 %v97
    %v238 = vunpack.c.l.b16 %v98
    %v239 = vunpack.c.l.b16 %v99
    %v240 = vunpack.c.h.b16 %v99
    %v241 = vunpack.c.l.b16 %v100
    %v242 = vpack.c.b16 %v185, %v182
    %v243 = vpack.c.b16 %v186, %v183
    %v244 = vpack.c.b16 %v187, %v184
    %v245 = vpack.c.b16 %v191, %v188
    %v246 = vpack.c.b16 %v192, %v189
    %v247 = vpack.c.b16 %v193, %v190
    %v248 = vpack.c.b16 %v197, %v194
    %v249 = vpack.c.b16 %v198, %v195
    %v250 = vpack.c.b16 %v199, %v196
    %v251 = vpack.c.b16 %v203, %v200
    %v252 = vpack.c.b16 %v204, %v201
    %v253 = vpack.c.b16 %v205, %v202
    %v254 = vpack.c.b16 %v209, %v206
    %v255 = vpack.c.b16 %v210, %v207
    %v256 = vpack.c.b16 %v211, %v208
    %v257 = vpack.c.b16 %v215, %v212
    %v258 = vpack.c.b16 %v216, %v213
    %v259 = vpack.c.b16 %v217, %v214
    %v260 = vpack.c.b16 %v221, %v218
    %v261 = vpack.c.b16 %v222, %v219
    %v262 = vpack.c.b16 %v223, %v220
    %v263 = vpack.c.b16 %v227, %v224
    %v264 = vpack.c.b16 %v228, %v225
    %v265 = vpack.c.b16 %v229, %v226
    %v266 = vpack.c.b16 %v233, %v230
    %v267 = vpack.c.b16 %v234, %v231
    %v268 = vpack.c.b16 %v235, %v232
    %v269 = vpack.c.b16 %v239, %v236
    %v270 = vpack.c.b16 %v240, %v237
    %v271 = vpack.c.b16 %v241, %v238
    %vm302 = vcmask 261120
    %v304 = vsel %vm302, %v140, 0
    %306 = vmatprep.subr.bf16.mxu0 %v243
    %307 = vmatpush1.bf16.msra.mxu0 %v242
    %308 = vmatprep.subr.bf16.mxu0 %v246
    %309 = vmatpush1.bf16.msra.mxu0 %v245
    %310 = vmatprep.subr.bf16.mxu0 %v249
    %311 = vmatpush1.bf16.msra.mxu0 %v248
    %312 = vmatprep.subr.bf16.mxu0 %v252
    %313 = vmatpush1.bf16.msra.mxu0 %v251
    %314 = vmatprep.subr.bf16.mxu0 %v255
    %315 = vmatpush1.bf16.msra.mxu0 %v254
    %316 = vmatprep.subr.bf16.mxu0 %v258
    %317 = vmatpush1.bf16.msra.mxu0 %v257
    %318 = vmatprep.subr.bf16.mxu0 %v261
    %319 = vmatpush1.bf16.msra.mxu0 %v260
    %320 = vmatprep.subr.bf16.mxu0 %v264
    %321 = vmatpush1.bf16.msra.mxu0 %v263
    %322 = vmatprep.subr.bf16.mxu0 %v267
    %323 = vmatpush1.bf16.msra.mxu0 %v266
    %324 = vmatprep.subr.bf16.mxu0 %v270
    %325 = vmatpush1.bf16.msra.mxu0 %v269
    %326 = vmatprep.subr.bf16.mxu0 0
    %327 = vmatpush1.bf16.msra.mxu0 0
    %328 = vmatprep.subr.bf16.mxu0 0
    %329 = vmatpush1.bf16.msra.mxu0 0
    %330 = vmatprep.subr.bf16.mxu0 0
    %331 = vmatpush1.bf16.msra.mxu0 0
    %332 = vmatprep.subr.bf16.mxu0 0
    %333 = vmatpush1.bf16.msra.mxu0 0
    %334 = vmatprep.subr.bf16.mxu0 0
    %335 = vmatpush1.bf16.msra.mxu0 0
    %336 = vmatprep.subr.bf16.mxu0 0
    %337 = vmatpush1.bf16.msra.mxu0 0
    %338 = vmatprep.mubr.bf16.mxu0 %v304
    %339 = vmatmul.mubr.bf16.gmra.mrb[0].mxu0 %v133
    %v340 = vpop.f32.mrb[0].mxu0
    %v341 = vadd.f32 %v106, %v340
    %v342 = vpop.f32.mrb[0].mxu0
    %v343 = vadd.f32 %v110, %v342
    %v344 = vpop.f32.mrb[0].mxu0
    %v345 = vpop.f32.mrb[0].mxu0
    %346 = vdwg.mxu0
    %347 = vmatprep.subr.bf16.mxu0 0
    %348 = vmatpush1.bf16.msra.mxu0 %v244
    %349 = vmatprep.subr.bf16.mxu0 0
    %350 = vmatpush1.bf16.msra.mxu0 %v247
    %351 = vmatprep.subr.bf16.mxu0 0
    %352 = vmatpush1.bf16.msra.mxu0 %v250
    %353 = vmatprep.subr.bf16.mxu0 0
    %354 = vmatpush1.bf16.msra.mxu0 %v253
    %355 = vmatprep.subr.bf16.mxu0 0
    %356 = vmatpush1.bf16.msra.mxu0 %v256
    %357 = vmatprep.subr.bf16.mxu0 0
    %358 = vmatpush1.bf16.msra.mxu0 %v259
    %359 = vmatprep.subr.bf16.mxu0 0
    %360 = vmatpush1.bf16.msra.mxu0 %v262
    %361 = vmatprep.subr.bf16.mxu0 0
    %362 = vmatpush1.bf16.msra.mxu0 %v265
    %363 = vmatprep.subr.bf16.mxu0 0
    %364 = vmatpush1.bf16.msra.mxu0 %v268
    %365 = vmatprep.subr.bf16.mxu0 0
    %366 = vmatpush1.bf16.msra.mxu0 %v271
    %367 = vmatprep.subr.bf16.mxu0 0
    %368 = vmatpush1.bf16.msra.mxu0 0
    %369 = vmatprep.subr.bf16.mxu0 0
    %370 = vmatpush1.bf16.msra.mxu0 0
    %371 = vmatprep.subr.bf16.mxu0 0
    %372 = vmatpush1.bf16.msra.mxu0 0
    %373 = vmatprep.subr.bf16.mxu0 0
    %374 = vmatpush1.bf16.msra.mxu0 0
    %375 = vmatprep.subr.bf16.mxu0 0
    %376 = vmatpush1.bf16.msra.mxu0 0
    %377 = vmatprep.subr.bf16.mxu0 0
    %378 = vmatpush1.bf16.msra.mxu0 0
    %379 = vmatprep.mubr.bf16.mxu0 %v304
    %380 = vmatmul.mubr.bf16.gmra.mrb[0].mxu0 %v133
    %v381 = vpop.f32.mrb[0].mxu0
    %v382 = vadd.f32 %v114, %v381
    %v383 = vpop.f32.mrb[0].mxu0
    %v384 = vpop.f32.mrb[0].mxu0
    %v385 = vpop.f32.mrb[0].mxu0
    %386 = vdwg.mxu0
    %v387 = vpack.c.bf16 %v59, %v59
    %v388 = vld [vmem:[%s7] sm:$0xff]
    %v389 = vld [vmem:[%s7 + $0x8] sm:$0xf]
    %v390 = vld [vmem:[%s7 + $0xc] sm:$0xff]
    %v391 = vld [vmem:[%s7 + $0x14] sm:$0xf]
    %v392 = vld [vmem:[%s7 + $0x18] sm:$0xff]
    %v393 = vld [vmem:[%s7 + $0x20] sm:$0xf]
    %v394 = vld [vmem:[%s7 + $0x24] sm:$0xff]
    %v395 = vld [vmem:[%s7 + $0x2c] sm:$0xf]
    %v396 = vld [vmem:[%s7 + $0x30] sm:$0xff]
    %v397 = vld [vmem:[%s7 + $0x38] sm:$0xf]
    %v398 = vld [vmem:[%s7 + $0x3c] sm:$0xff]
    %v399 = vld [vmem:[%s7 + $0x44] sm:$0xf]
    %v400 = vld [vmem:[%s7 + $0x48] sm:$0xff]
    %v401 = vld [vmem:[%s7 + $0x50] sm:$0xf]
    %v402 = vld [vmem:[%s7 + $0x54] sm:$0xff]
    %v403 = vld [vmem:[%s7 + $0x5c] sm:$0xf]
    %v404 = vld [vmem:[%s7 + $0x60] sm:$0xff]
    %v405 = vld [vmem:[%s7 + $0x68] sm:$0xf]
    %v406 = vld [vmem:[%s7 + $0x6c] sm:$0xff]
    %v407 = vld [vmem:[%s7 + $0x74] sm:$0xf]
    %v408 = vld [vmem:[%s7 + $0x78] sm:$0xff]
    %v409 = vld [vmem:[%s7 + $0x80] sm:$0xf]
    %v410 = vld [vmem:[%s7 + $0x84] sm:$0xff]
    %v411 = vld [vmem:[%s7 + $0x8c] sm:$0xf]
    %v412 = vld [vmem:[%s7 + $0x90] sm:$0xff]
    %v413 = vld [vmem:[%s7 + $0x98] sm:$0xf]
    %v414 = vld [vmem:[%s7 + $0x9c] sm:$0xff]
    %v415 = vld [vmem:[%s7 + $0xa4] sm:$0xf]
    %v416 = vld [vmem:[%s7 + $0xa8] sm:$0xff]
    %v417 = vld [vmem:[%s7 + $0xb0] sm:$0xf]
    %v418 = vld [vmem:[%s7 + $0xb4] sm:$0xff]
    %v419 = vld [vmem:[%s7 + $0xbc] sm:$0xf]
    %v420 = vld [vmem:[%s8] sm:$0x7]
    %v422 = vlaneseq
    %v423 = vshrl.u32 %v422, 7
    %v424 = vsub.s32 0, %v423
    %v425 = vrot.slane %v420, %v424
    %v426 = vlaneseq
    %v427 = vshrl.u32 %v426, 7
    %v428 = vsub.s32 1, %v427
    %v429 = vrot.slane %v420, %v428
    %v430 = vlaneseq
    %v431 = vshrl.u32 %v430, 7
    %v432 = vsub.s32 2, %v431
    %v433 = vrot.slane %v420, %v432
    %v469 = vunpack.c.l.b16 %v388
    %v470 = vunpack.c.h.b16 %v388
    %v471 = vunpack.c.l.b16 %v389
    %v472 = vunpack.c.l.b16 %v390
    %v473 = vunpack.c.h.b16 %v390
    %v474 = vunpack.c.l.b16 %v391
    %v475 = vunpack.c.l.b16 %v392
    %v476 = vunpack.c.h.b16 %v392
    %v477 = vunpack.c.l.b16 %v393
    %v478 = vunpack.c.l.b16 %v394
    %v479 = vunpack.c.h.b16 %v394
    %v480 = vunpack.c.l.b16 %v395
    %v481 = vunpack.c.l.b16 %v396
    %v482 = vunpack.c.h.b16 %v396
    %v483 = vunpack.c.l.b16 %v397
    %v484 = vunpack.c.l.b16 %v398
    %v485 = vunpack.c.h.b16 %v398
    %v486 = vunpack.c.l.b16 %v399
    %v487 = vunpack.c.l.b16 %v400
    %v488 = vunpack.c.h.b16 %v400
    %v489 = vunpack.c.l.b16 %v401
    %v490 = vunpack.c.l.b16 %v402
    %v491 = vunpack.c.h.b16 %v402
    %v492 = vunpack.c.l.b16 %v403
    %v493 = vunpack.c.l.b16 %v404
    %v494 = vunpack.c.h.b16 %v404
    %v495 = vunpack.c.l.b16 %v405
    %v496 = vunpack.c.l.b16 %v406
    %v497 = vunpack.c.h.b16 %v406
    %v498 = vunpack.c.l.b16 %v407
    %v499 = vunpack.c.l.b16 %v408
    %v500 = vunpack.c.h.b16 %v408
    %v501 = vunpack.c.l.b16 %v409
    %v502 = vunpack.c.l.b16 %v410
    %v503 = vunpack.c.h.b16 %v410
    %v504 = vunpack.c.l.b16 %v411
    %v505 = vunpack.c.l.b16 %v412
    %v506 = vunpack.c.h.b16 %v412
    %v507 = vunpack.c.l.b16 %v413
    %v508 = vunpack.c.l.b16 %v414
    %v509 = vunpack.c.h.b16 %v414
    %v510 = vunpack.c.l.b16 %v415
    %v511 = vunpack.c.l.b16 %v416
    %v512 = vunpack.c.h.b16 %v416
    %v513 = vunpack.c.l.b16 %v417
    %v514 = vunpack.c.l.b16 %v418
    %v515 = vunpack.c.h.b16 %v418
    %v516 = vunpack.c.l.b16 %v419
    %v517 = vpack.c.b16 %v472, %v469
    %v518 = vpack.c.b16 %v473, %v470
    %v519 = vpack.c.b16 %v474, %v471
    %v520 = vpack.c.b16 %v478, %v475
    %v521 = vpack.c.b16 %v479, %v476
    %v522 = vpack.c.b16 %v480, %v477
    %v523 = vpack.c.b16 %v484, %v481
    %v524 = vpack.c.b16 %v485, %v482
    %v525 = vpack.c.b16 %v486, %v483
    %v526 = vpack.c.b16 %v490, %v487
    %v527 = vpack.c.b16 %v491, %v488
    %v528 = vpack.c.b16 %v492, %v489
    %v529 = vpack.c.b16 %v496, %v493
    %v530 = vpack.c.b16 %v497, %v494
    %v531 = vpack.c.b16 %v498, %v495
    %v532 = vpack.c.b16 %v502, %v499
    %v533 = vpack.c.b16 %v503, %v500
    %v534 = vpack.c.b16 %v504, %v501
    %v535 = vpack.c.b16 %v508, %v505
    %v536 = vpack.c.b16 %v509, %v506
    %v537 = vpack.c.b16 %v510, %v507
    %v538 = vpack.c.b16 %v514, %v511
    %v539 = vpack.c.b16 %v515, %v512
    %v540 = vpack.c.b16 %v516, %v513
    %565 = vmatprep.subr.bf16.mxu0 %v518
    %566 = vmatpush1.bf16.msra.mxu0 %v517
    %567 = vmatprep.subr.bf16.mxu0 %v521
    %568 = vmatpush1.bf16.msra.mxu0 %v520
    %569 = vmatprep.subr.bf16.mxu0 %v524
    %570 = vmatpush1.bf16.msra.mxu0 %v523
    %571 = vmatprep.subr.bf16.mxu0 %v527
    %572 = vmatpush1.bf16.msra.mxu0 %v526
    %573 = vmatprep.subr.bf16.mxu0 %v530
    %574 = vmatpush1.bf16.msra.mxu0 %v529
    %575 = vmatprep.subr.bf16.mxu0 %v533
    %576 = vmatpush1.bf16.msra.mxu0 %v532
    %577 = vmatprep.subr.bf16.mxu0 %v536
    %578 = vmatpush1.bf16.msra.mxu0 %v535
    %579 = vmatprep.subr.bf16.mxu0 %v539
    %580 = vmatpush1.bf16.msra.mxu0 %v538
    %581 = vmatprep.subr.bf16.mxu0 0
    %582 = vmatpush1.bf16.msra.mxu0 0
    %583 = vmatprep.subr.bf16.mxu0 0
    %584 = vmatpush1.bf16.msra.mxu0 0
    %585 = vmatprep.subr.bf16.mxu0 0
    %586 = vmatpush1.bf16.msra.mxu0 0
    %587 = vmatprep.subr.bf16.mxu0 0
    %588 = vmatpush1.bf16.msra.mxu0 0
    %589 = vmatprep.subr.bf16.mxu0 0
    %590 = vmatpush1.bf16.msra.mxu0 0
    %591 = vmatprep.subr.bf16.mxu0 0
    %592 = vmatpush1.bf16.msra.mxu0 0
    %593 = vmatprep.subr.bf16.mxu0 0
    %594 = vmatpush1.bf16.msra.mxu0 0
    %595 = vmatprep.subr.bf16.mxu0 0
    %596 = vmatpush1.bf16.msra.mxu0 0
    %597 = vmatprep.mubr.bf16.mxu0 0
    %598 = vmatmul.mubr.bf16.gmra.mrb[0].mxu0 %v387
    %v599 = vpop.f32.mrb[0].mxu0
    %v600 = vadd.f32 %v425, %v599
    %v601 = vpop.f32.mrb[0].mxu0
    %v602 = vadd.f32 %v429, %v601
    %v603 = vpop.f32.mrb[0].mxu0
    %v604 = vpop.f32.mrb[0].mxu0
    %605 = vdwg.mxu0
    %606 = vmatprep.subr.bf16.mxu0 0
    %607 = vmatpush1.bf16.msra.mxu0 %v519
    %608 = vmatprep.subr.bf16.mxu0 0
    %609 = vmatpush1.bf16.msra.mxu0 %v522
    %610 = vmatprep.subr.bf16.mxu0 0
    %611 = vmatpush1.bf16.msra.mxu0 %v525
    %612 = vmatprep.subr.bf16.mxu0 0
    %613 = vmatpush1.bf16.msra.mxu0 %v528
    %614 = vmatprep.subr.bf16.mxu0 0
    %615 = vmatpush1.bf16.msra.mxu0 %v531
    %616 = vmatprep.subr.bf16.mxu0 0
    %617 = vmatpush1.bf16.msra.mxu0 %v534
    %618 = vmatprep.subr.bf16.mxu0 0
    %619 = vmatpush1.bf16.msra.mxu0 %v537
    %620 = vmatprep.subr.bf16.mxu0 0
    %621 = vmatpush1.bf16.msra.mxu0 %v540
    %622 = vmatprep.subr.bf16.mxu0 0
    %623 = vmatpush1.bf16.msra.mxu0 0
    %624 = vmatprep.subr.bf16.mxu0 0
    %625 = vmatpush1.bf16.msra.mxu0 0
    %626 = vmatprep.subr.bf16.mxu0 0
    %627 = vmatpush1.bf16.msra.mxu0 0
    %628 = vmatprep.subr.bf16.mxu0 0
    %629 = vmatpush1.bf16.msra.mxu0 0
    %630 = vmatprep.subr.bf16.mxu0 0
    %631 = vmatpush1.bf16.msra.mxu0 0
    %632 = vmatprep.subr.bf16.mxu0 0
    %633 = vmatpush1.bf16.msra.mxu0 0
    %634 = vmatprep.subr.bf16.mxu0 0
    %635 = vmatpush1.bf16.msra.mxu0 0
    %636 = vmatprep.subr.bf16.mxu0 0
    %637 = vmatpush1.bf16.msra.mxu0 0
    %638 = vmatprep.mubr.bf16.mxu0 0
    %639 = vmatmul.mubr.bf16.gmra.mrb[0].mxu0 %v387
    %v640 = vpop.f32.mrb[0].mxu0
    %v641 = vadd.f32 %v433, %v640
    %v642 = vpop.f32.mrb[0].mxu0
    %v643 = vpop.f32.mrb[0].mxu0
    %v644 = vpop.f32.mrb[0].mxu0
    %645 = vdwg.mxu0
    %v646 = vadd.f32 %v341, %v600
    %v647 = vxor.u32 %v646, 2147483648
    %v648 = vmul.f32 %v647, 1.442695
    %v649 = vpow.pop %v648
    %v650 = vadd.f32 %v649, 1.0
    %v651 = vrcp.pop %v650
    %v652 = vmul.f32 1.0, %v651
    %v653 = vadd.f32 %v343, %v602
    %v654 = vxor.u32 %v653, 2147483648
    %v655 = vmul.f32 %v654, 1.442695
    %v656 = vpow.pop %v655
    %v657 = vadd.f32 %v656, 1.0
    %v658 = vrcp.pop %v657
    %v659 = vmul.f32 1.0, %v658
    %v660 = vmul.f32 %v652, %v641
    %v661 = vadd.f32 %v382, %v660
    %v662 = vtanh.pop %v661
    %v663 = vsub.f32 1.0, %v659
    %v664 = vmul.f32 %v663, %v662
    %v665 = vmul.f32 %v659, %v59
    %v666 = vadd.f32 %v664, %v665
    %667 = vst [vmem:[#allocation2] sm:$0x3] %v666
    %v668 = vpack.c.bf16 %v666, %v666
    %v669 = vld [vmem:[%s9] sm:$0xf]
    %v670 = vld [vmem:[%s9 + $0x4] sm:$0xf]
    %v671 = vld [vmem:[%s9 + $0x8] sm:$0xf]
    %v672 = vld [vmem:[%s9 + $0xc] sm:$0xf]
    %v673 = vld [vmem:[%s9 + $0x10] sm:$0xf]
    %v674 = vld [vmem:[%s9 + $0x14] sm:$0xf]
    %v675 = vld [vmem:[%s9 + $0x18] sm:$0xf]
    %v676 = vld [vmem:[%s9 + $0x1c] sm:$0xf]
    %v677 = vld [vmem:[%s9 + $0x20] sm:$0xf]
    %v678 = vld [vmem:[%s9 + $0x24] sm:$0xf]
    %v679 = vld [vmem:[%s9 + $0x28] sm:$0xf]
    %v680 = vld [vmem:[%s9 + $0x2c] sm:$0xf]
    %v681 = vld [vmem:[%s9 + $0x30] sm:$0xf]
    %v682 = vld [vmem:[%s9 + $0x34] sm:$0xf]
    %v683 = vld [vmem:[%s9 + $0x38] sm:$0xf]
    %v684 = vld [vmem:[%s9 + $0x3c] sm:$0xf]
    %v685 = vld [vmem:[%s10] sm:$0x1]
    %v687 = vlaneseq
    %v688 = vshrl.u32 %v687, 7
    %v689 = vsub.s32 0, %v688
    %v690 = vrot.slane %v685, %v689
    %v708 = vunpack.c.l.b16 %v669
    %v709 = vunpack.c.l.b16 %v670
    %v710 = vunpack.c.l.b16 %v671
    %v711 = vunpack.c.l.b16 %v672
    %v712 = vunpack.c.l.b16 %v673
    %v713 = vunpack.c.l.b16 %v674
    %v714 = vunpack.c.l.b16 %v675
    %v715 = vunpack.c.l.b16 %v676
    %v716 = vunpack.c.l.b16 %v677
    %v717 = vunpack.c.l.b16 %v678
    %v718 = vunpack.c.l.b16 %v679
    %v719 = vunpack.c.l.b16 %v680
    %v720 = vunpack.c.l.b16 %v681
    %v721 = vunpack.c.l.b16 %v682
    %v722 = vunpack.c.l.b16 %v683
    %v723 = vunpack.c.l.b16 %v684
    %v724 = vpack.c.b16 %v709, %v708
    %v725 = vpack.c.b16 %v711, %v710
    %v726 = vpack.c.b16 %v713, %v712
    %v727 = vpack.c.b16 %v715, %v714
    %v728 = vpack.c.b16 %v717, %v716
    %v729 = vpack.c.b16 %v719, %v718
    %v730 = vpack.c.b16 %v721, %v720
    %v731 = vpack.c.b16 %v723, %v722
    %740 = vmatprep.subr.bf16.mxu0 0
    %741 = vmatpush1.bf16.msra.mxu0 %v724
    %742 = vmatprep.subr.bf16.mxu0 0
    %743 = vmatpush1.bf16.msra.mxu0 %v725
    %744 = vmatprep.subr.bf16.mxu0 0
    %745 = vmatpush1.bf16.msra.mxu0 %v726
    %746 = vmatprep.subr.bf16.mxu0 0
    %747 = vmatpush1.bf16.msra.mxu0 %v727
    %748 = vmatprep.subr.bf16.mxu0 0
    %749 = vmatpush1.bf16.msra.mxu0 %v728
    %750 = vmatprep.subr.bf16.mxu0 0
    %751 = vmatpush1.bf16.msra.mxu0 %v729
    %752 = vmatprep.subr.bf16.mxu0 0
    %753 = vmatpush1.bf16.msra.mxu0 %v730
    %754 = vmatprep.subr.bf16.mxu0 0
    %755 = vmatpush1.bf16.msra.mxu0 %v731
    %756 = vmatprep.subr.bf16.mxu0 0
    %757 = vmatpush1.bf16.msra.mxu0 0
    %758 = vmatprep.subr.bf16.mxu0 0
    %759 = vmatpush1.bf16.msra.mxu0 0
    %760 = vmatprep.subr.bf16.mxu0 0
    %761 = vmatpush1.bf16.msra.mxu0 0
    %762 = vmatprep.subr.bf16.mxu0 0
    %763 = vmatpush1.bf16.msra.mxu0 0
    %764 = vmatprep.subr.bf16.mxu0 0
    %765 = vmatpush1.bf16.msra.mxu0 0
    %766 = vmatprep.subr.bf16.mxu0 0
    %767 = vmatpush1.bf16.msra.mxu0 0
    %768 = vmatprep.subr.bf16.mxu0 0
    %769 = vmatpush1.bf16.msra.mxu0 0
    %770 = vmatprep.subr.bf16.mxu0 0
    %771 = vmatpush1.bf16.msra.mxu0 0
    %772 = vmatprep.mubr.bf16.mxu0 0
    %773 = vmatmul.mubr.bf16.gmra.mrb[0].mxu0 %v668
    %v774 = vpop.f32.mrb[0].mxu0
    %v775 = vadd.f32 %v690, %v774
    %v776 = vpop.f32.mrb[0].mxu0
    %v777 = vpop.f32.mrb[0].mxu0
    %v778 = vpop.f32.mrb[0].mxu0
    %779 = vdwg.mxu0
    %v780 = vld [vmem:[%s2] sm:$0xf]
    %v781 = vld [vmem:[%s2 + $0x4] sm:$0xf]
    %v782 = vld [vmem:[%s2 + $0x8] sm:$0xf]
    %v783 = vld [vmem:[%s2 + $0xc] sm:$0xf]
    %v784 = vld [vmem:[%s11] sm:$0xf]
    %v785 = vld [vmem:[%s11 + $0x4] sm:$0xf]
    %v786 = vld [vmem:[%s11 + $0x8] sm:$0xf]
    %v787 = vld [vmem:[%s11 + $0xc] sm:$0xf]
    %v788 = vld [vmem:[%s11 + $0x10] sm:$0xf]
    %v789 = vld [vmem:[%s11 + $0x14] sm:$0xf]
    %v790 = vld [vmem:[%s11 + $0x18] sm:$0xf]
    %v791 = vld [vmem:[%s11 + $0x1c] sm:$0xf]
    %v792 = vld [vmem:[%s11 + $0x20] sm:$0xf]
    %v793 = vld [vmem:[%s11 + $0x24] sm:$0xf]
    %v794 = vld [vmem:[%s11 + $0x28] sm:$0xf]
    %v795 = vld [vmem:[%s11 + $0x2c] sm:$0xf]
    %v796 = vld [vmem:[%s11 + $0x30] sm:$0xf]
    %v797 = vld [vmem:[%s11 + $0x34] sm:$0xf]
    %v798 = vld [vmem:[%s11 + $0x38] sm:$0xf]
    %v799 = vld [vmem:[%s11 + $0x3c] sm:$0xf]
    %v800 = vld [vmem:[%s12] sm:$0x1]
    %v802 = vlaneseq
    %v803 = vshrl.u32 %v802, 7
    %v804 = vsub.s32 0, %v803
    %v805 = vrot.slane %v800, %v804
    %v811 = vunpack.c.l.b16 %v780
    %v812 = vunpack.c.l.b16 %v781
    %v813 = vunpack.c.l.b16 %v782
    %v814 = vunpack.c.l.b16 %v783
    %v815 = vpack.c.b16 %v812, %v811
    %v816 = vpack.c.b16 %v814, %v813
    %v835 = vunpack.c.l.b16 %v784
    %v836 = vunpack.c.l.b16 %v785
    %v837 = vunpack.c.l.b16 %v786
    %v838 = vunpack.c.l.b16 %v787
    %v839 = vunpack.c.l.b16 %v788
    %v840 = vunpack.c.l.b16 %v789
    %v841 = vunpack.c.l.b16 %v790
    %v842 = vunpack.c.l.b16 %v791
    %v843 = vunpack.c.l.b16 %v792
    %v844 = vunpack.c.l.b16 %v793
    %v845 = vunpack.c.l.b16 %v794
    %v846 = vunpack.c.l.b16 %v795
    %v847 = vunpack.c.l.b16 %v796
    %v848 = vunpack.c.l.b16 %v797
    %v849 = vunpack.c.l.b16 %v798
    %v850 = vunpack.c.l.b16 %v799
    %v851 = vpack.c.b16 %v836, %v835
    %v852 = vpack.c.b16 %v838, %v837
    %v853 = vpack.c.b16 %v840, %v839
    %v854 = vpack.c.b16 %v842, %v841
    %v855 = vpack.c.b16 %v844, %v843
    %v856 = vpack.c.b16 %v846, %v845
    %v857 = vpack.c.b16 %v848, %v847
    %v858 = vpack.c.b16 %v850, %v849
    %867 = vmatprep.subr.bf16.mxu0 0
    %868 = vmatpush1.bf16.msra.mxu0 %v851
    %869 = vmatprep.subr.bf16.mxu0 0
    %870 = vmatpush1.bf16.msra.mxu0 %v852
    %871 = vmatprep.subr.bf16.mxu0 0
    %872 = vmatpush1.bf16.msra.mxu0 %v853
    %873 = vmatprep.subr.bf16.mxu0 0
    %874 = vmatpush1.bf16.msra.mxu0 %v854
    %875 = vmatprep.subr.bf16.mxu0 0
    %876 = vmatpush1.bf16.msra.mxu0 %v855
    %877 = vmatprep.subr.bf16.mxu0 0
    %878 = vmatpush1.bf16.msra.mxu0 %v856
    %879 = vmatprep.subr.bf16.mxu0 0
    %880 = vmatpush1.bf16.msra.mxu0 %v857
    %881 = vmatprep.subr.bf16.mxu0 0
    %882 = vmatpush1.bf16.msra.mxu0 %v858
    %883 = vmatprep.subr.bf16.mxu0 0
    %884 = vmatpush1.bf16.msra.mxu0 0
    %885 = vmatprep.subr.bf16.mxu0 0
    %886 = vmatpush1.bf16.msra.mxu0 0
    %887 = vmatprep.subr.bf16.mxu0 0
    %888 = vmatpush1.bf16.msra.mxu0 0
    %889 = vmatprep.subr.bf16.mxu0 0
    %890 = vmatpush1.bf16.msra.mxu0 0
    %891 = vmatprep.subr.bf16.mxu0 0
    %892 = vmatpush1.bf16.msra.mxu0 0
    %893 = vmatprep.subr.bf16.mxu0 0
    %894 = vmatpush1.bf16.msra.mxu0 0
    %895 = vmatprep.subr.bf16.mxu0 0
    %896 = vmatpush1.bf16.msra.mxu0 0
    %897 = vmatprep.subr.bf16.mxu0 0
    %898 = vmatpush1.bf16.msra.mxu0 0
    %899 = vmatprep.mubr.bf16.mxu0 0
    %900 = vmatmul.mubr.bf16.gmra.mrb[0].mxu0 %v815
    %v901 = vpop.f32.mrb[0].mxu0
    %v902 = vadd.f32 %v805, %v901
    %v903 = vpop.f32.mrb[0].mxu0
    %v904 = vpop.f32.mrb[0].mxu0
    %v905 = vadd.f32 %v805, %v904
    %v906 = vpop.f32.mrb[0].mxu0
    %907 = vmatprep.mubr.bf16.mxu0 0
    %908 = vmatmul.mubr.bf16.gmra.mrb[0].mxu0 %v816
    %v909 = vpop.f32.mrb[0].mxu0
    %v910 = vadd.f32 %v805, %v909
    %v911 = vpop.f32.mrb[0].mxu0
    %v912 = vpop.f32.mrb[0].mxu0
    %v913 = vadd.f32 %v805, %v912
    %v914 = vpop.f32.mrb[0].mxu0
    %915 = vdwg.mxu0
    %v916 = vld [vmem:[%s3] sm:$0xf]
    %v917 = vld [vmem:[%s3 + $0x4] sm:$0xf]
    %v918 = vld [vmem:[%s3 + $0x8] sm:$0xf]
    %v919 = vld [vmem:[%s3 + $0xc] sm:$0xf]
    %v920 = vld [vmem:[%s13] sm:$0xf]
    %v921 = vld [vmem:[%s13 + $0x4] sm:$0xf]
    %v922 = vld [vmem:[%s13 + $0x8] sm:$0xf]
    %v923 = vld [vmem:[%s13 + $0xc] sm:$0xf]
    %v924 = vld [vmem:[%s13 + $0x10] sm:$0xf]
    %v925 = vld [vmem:[%s13 + $0x14] sm:$0xf]
    %v926 = vld [vmem:[%s13 + $0x18] sm:$0xf]
    %v927 = vld [vmem:[%s13 + $0x1c] sm:$0xf]
    %v928 = vld [vmem:[%s14] sm:$0x1]
    %v930 = vlaneseq
    %v931 = vshrl.u32 %v930, 7
    %v932 = vsub.s32 0, %v931
    %v933 = vrot.slane %v928, %v932
    %v939 = vunpack.c.l.b16 %v916
    %v940 = vunpack.c.l.b16 %v917
    %v941 = vunpack.c.l.b16 %v918
    %v942 = vunpack.c.l.b16 %v919
    %v943 = vpack.c.b16 %v940, %v939
    %v944 = vpack.c.b16 %v942, %v941
    %v953 = vunpack.c.l.b16 %v920
    %v954 = vunpack.c.l.b16 %v921
    %v955 = vunpack.c.l.b16 %v922
    %v956 = vunpack.c.l.b16 %v923
    %v957 = vunpack.c.l.b16 %v924
    %v958 = vunpack.c.l.b16 %v925
    %v959 = vunpack.c.l.b16 %v926
    %v960 = vunpack.c.l.b16 %v927
    %v961 = vpack.c.b16 %v954, %v953
    %v962 = vpack.c.b16 %v956, %v955
    %v963 = vpack.c.b16 %v958, %v957
    %v964 = vpack.c.b16 %v960, %v959
    %vm969 = vcmask 523264
    %v971 = vsel %vm969, %v943, 0
    %v974 = vsel %vm969, %v944, 0
    %976 = vmatprep.subr.bf16.mxu0 0
    %977 = vmatpush1.bf16.msra.mxu0 %v961
    %978 = vmatprep.subr.bf16.mxu0 0
    %979 = vmatpush1.bf16.msra.mxu0 %v962
    %980 = vmatprep.subr.bf16.mxu0 0
    %981 = vmatpush1.bf16.msra.mxu0 %v963
    %982 = vmatprep.subr.bf16.mxu0 0
    %983 = vmatpush1.bf16.msra.mxu0 %v964
    %984 = vmatprep.subr.bf16.mxu0 0
    %985 = vmatpush1.bf16.msra.mxu0 0
    %986 = vmatprep.subr.bf16.mxu0 0
    %987 = vmatpush1.bf16.msra.mxu0 0
    %988 = vmatprep.subr.bf16.mxu0 0
    %989 = vmatpush1.bf16.msra.mxu0 0
    %990 = vmatprep.subr.bf16.mxu0 0
    %991 = vmatpush1.bf16.msra.mxu0 0
    %992 = vmatprep.subr.bf16.mxu0 0
    %993 = vmatpush1.bf16.msra.mxu0 0
    %994 = vmatprep.subr.bf16.mxu0 0
    %995 = vmatpush1.bf16.msra.mxu0 0
    %996 = vmatprep.subr.bf16.mxu0 0
    %997 = vmatpush1.bf16.msra.mxu0 0
    %998 = vmatprep.subr.bf16.mxu0 0
    %999 = vmatpush1.bf16.msra.mxu0 0
    %1000 = vmatprep.subr.bf16.mxu0 0
    %1001 = vmatpush1.bf16.msra.mxu0 0
    %1002 = vmatprep.subr.bf16.mxu0 0
    %1003 = vmatpush1.bf16.msra.mxu0 0
    %1004 = vmatprep.subr.bf16.mxu0 0
    %1005 = vmatpush1.bf16.msra.mxu0 0
    %1006 = vmatprep.subr.bf16.mxu0 0
    %1007 = vmatpush1.bf16.msra.mxu0 0
    %1008 = vmatprep.mubr.bf16.mxu0 0
    %1009 = vmatmul.mubr.bf16.gmra.mrb[0].mxu0 %v971
    %v1010 = vpop.f32.mrb[0].mxu0
    %v1011 = vadd.f32 %v933, %v1010
    %v1012 = vpop.f32.mrb[0].mxu0
    %v1013 = vpop.f32.mrb[0].mxu0
    %v1014 = vadd.f32 %v933, %v1013
    %v1015 = vpop.f32.mrb[0].mxu0
    %1016 = vmatprep.mubr.bf16.mxu0 0
    %1017 = vmatmul.mubr.bf16.gmra.mrb[0].mxu0 %v974
    %v1018 = vpop.f32.mrb[0].mxu0
    %v1019 = vadd.f32 %v933, %v1018
    %v1020 = vpop.f32.mrb[0].mxu0
    %v1021 = vpop.f32.mrb[0].mxu0
    %v1022 = vadd.f32 %v933, %v1021
    %v1023 = vpop.f32.mrb[0].mxu0
    %1024 = vdwg.mxu0
    %v1025 = vadd.f32 %v902, %v1011
    %v1026 = vadd.f32 %v905, %v1014
    %v1027 = vadd.f32 %v910, %v1019
    %v1028 = vadd.f32 %v913, %v1022
    %v1031 = vunpack.c.l.s4 1966171168
    %v1032 = vunpack.c.0.s8 %v1031
    %v1033 = vlaneseq
    %v1034 = vshrl.u32 %v1033, 7
    %v1035 = vsub.s32 %v1032, %v1034
    %v1036 = vrot.slane %v775, %v1035
    %v1037 = vcombine.high %v1036, %v1036
    %v1039 = vunpack.c.l.s4 1966171168
    %v1040 = vunpack.c.0.s8 %v1039
    %v1041 = vlaneseq
    %v1042 = vshrl.u32 %v1041, 7
    %v1043 = vsub.s32 %v1040, %v1042
    %v1044 = vrot.slane %v1036, %v1043
    %v1046 = vunpack.c.l.s4 1966171168
    %v1047 = vunpack.c.0.s8 %v1046
    %v1048 = vlaneseq
    %v1049 = vshrl.u32 %v1048, 7
    %v1050 = vsub.s32 %v1047, %v1049
    %v1051 = vrot.slane %v1037, %v1050
    %v1052 = vlaneseq
    %v1053 = vshrl.u32 %v1052, 7
    %v1054 = vsub.s32 0, %v1053
    %v1055 = vrot.slane %v1044, %v1054
    %v1056 = vlaneseq
    %v1057 = vshrl.u32 %v1056, 7
    %v1058 = vsub.s32 0, %v1057
    %v1059 = vrot.slane %v1051, %v1058
    %v1062 = vadd.f32 %v1025, %v1055
    %v1063 = vadd.f32 %v1026, %v1055
    %v1064 = vadd.f32 %v1027, %v1059
    %v1065 = vadd.f32 %v1028, %v1059
    %v1066 = vtanh.pop %v1062
    %v1067 = vtanh.pop %v1063
    %v1068 = vtanh.pop %v1064
    %v1069 = vtanh.pop %v1065
    %v1070 = vld [vmem:[%s15] sm:$0x1]
    %v1072 = vlaneseq
    %v1073 = vshrl.u32 %v1072, 7
    %v1074 = vsub.s32 0, %v1073
    %v1075 = vrot.slane %v1070, %v1074
    %v1077 = vmul.f32 %v1066, %v1075
    %v1078 = vmul.f32 %v1067, %v1075
    %v1079 = vmul.f32 %v1068, %v1075
    %v1080 = vmul.f32 %v1069, %v1075
    %1081 = vadd.xlane.f32.xlu0 %v1077
    %v1082 = vpop.xlane.xlu0 %1081
    %1083 = vadd.xlane.f32.xlu0 %v1078
    %v1084 = vpop.xlane.xlu0 %1083
    %1085 = vadd.xlane.f32.xlu0 %v1079
    %v1086 = vpop.xlane.xlu0 %1085
    %1087 = vadd.xlane.f32.xlu0 %v1080
    %v1088 = vpop.xlane.xlu0 %1087
    %v1089 = vxor.u32 %v1082, 2147483648
    %v1090 = vxor.u32 %v1084, 2147483648
    %v1091 = vxor.u32 %v1086, 2147483648
    %v1092 = vxor.u32 %v1088, 2147483648
    %v1093 = vmul.f32 %v1089, 1.442695
    %v1094 = vpow.pop %v1093
    %v1095 = vmul.f32 %v1090, 1.442695
    %v1096 = vpow.pop %v1095
    %v1097 = vmul.f32 %v1091, 1.442695
    %v1098 = vpow.pop %v1097
    %v1099 = vmul.f32 %v1092, 1.442695
    %v1100 = vpow.pop %v1099
    %v1101 = vadd.f32 %v1094, 1.0
    %v1102 = vadd.f32 %v1096, 1.0
    %v1103 = vadd.f32 %v1098, 1.0
    %v1104 = vadd.f32 %v1100, 1.0
    %v1105 = vrcp.pop %v1101
    %v1106 = vmul.f32 1.0, %v1105
    %v1107 = vrcp.pop %v1102
    %v1108 = vmul.f32 1.0, %v1107
    %v1109 = vrcp.pop %v1103
    %v1110 = vmul.f32 1.0, %v1109
    %v1111 = vrcp.pop %v1104
    %v1112 = vmul.f32 1.0, %v1111
    %v1113 = vld [vmem:[%s4] sm:$0x3]
    %v1115 = vlaneseq
    %v1116 = vshrl.u32 %v1115, 7
    %v1117 = vsub.s32 0, %v1116
    %v1118 = vrot.slane %v1113, %v1117
    %1120 = vbcast.lane.b32.xlu0 %v1118, 256
    %v1121 = vpop.permute.xlu0 %1120
    %s1123 = sor.u32 256, 8
    %1124 = vbcast.lane.b32.xlu0 %v1118, %s1123
    %v1125 = vpop.permute.xlu0 %1124
    %v1126 = vlaneseq
    %v1127 = vshrl.u32 %v1126, 7
    %v1128 = vsub.s32 1, %v1127
    %v1129 = vrot.slane %v1113, %v1128
    %1131 = vbcast.lane.b32.xlu0 %v1129, 256
    %v1132 = vpop.permute.xlu0 %1131
    %s1134 = sor.u32 256, 8
    %1135 = vbcast.lane.b32.xlu0 %v1129, %s1134
    %v1136 = vpop.permute.xlu0 %1135
    %v1141 = vmul.f32 %v1106, %v1121
    %v1142 = vmul.f32 %v1108, %v1125
    %v1143 = vmul.f32 %v1110, %v1132
    %v1144 = vmul.f32 %v1112, %v1136
    %1149 = vset.pattern.permute.xlu0 0
    %1150 = vperm.xlu0 %1149, %v1141
    %v1151 = vpop.permute.xlu0 %1150
    %1152 = vset.pattern.permute.xlu0 0
    %1153 = vperm.xlu0 %1152, %v1142
    %v1154 = vpop.permute.xlu0 %1153
    %1155 = vset.pattern.permute.xlu0 0
    %1156 = vperm.xlu0 %1155, %v1143
    %v1157 = vpop.permute.xlu0 %1156
    %1158 = vset.pattern.permute.xlu0 0
    %1159 = vperm.xlu0 %1158, %v1144
    %v1160 = vpop.permute.xlu0 %1159
    %v1161 = vlaneseq
    %v1162 = vand.u32 %v1161, 127
    %v1163 = vlaneseq
    %v1164 = vshrl.u32 %v1163, 7
    %v1165 = vsub.s32 %v1162, %v1164
    %v1166 = vrot.slane %v1151, %v1165
    %v1167 = vadd.s32 %v1162, 4294967288
    %v1168 = vlaneseq
    %v1169 = vshrl.u32 %v1168, 7
    %v1170 = vsub.s32 %v1167, %v1169
    %v1171 = vrot.slane %v1154, %v1170
    %vm1172 = vcmask 130112
    %v1173 = vsel %vm1172, %v1171, %v1166
    %v1174 = vlaneseq
    %v1175 = vshrl.u32 %v1174, 7
    %v1176 = vsub.s32 %v1162, %v1175
    %v1177 = vrot.slane %v1157, %v1176
    %v1178 = vlaneseq
    %v1179 = vshrl.u32 %v1178, 7
    %v1180 = vsub.s32 %v1167, %v1179
    %v1181 = vrot.slane %v1160, %v1180
    %v1182 = vsel %vm1172, %v1181, %v1177
    %vm1183 = vcmask 1041409
    %v1184 = vsel %vm1183, %v1182, %v1173
    %vm1186 = vcmask 123904
    %v1187 = vsel %vm1186, %v1184, 0.0
    %1188 = vadd.xlane.f32.xlu0 %v1187
    %v1189 = vpop.xlane.xlu0 %1188
    %v1191 = vlaneseq
    %v1192 = vshrl.u32 %v1191, 7
    %v1193 = vsub.s32 0, %v1192
    %v1194 = vrot.slane %v1189, %v1193
    %v1195 = vlaneseq
    %v1196 = vshrl.u32 %v1195, 7
    %v1197 = vsub.s32 1, %v1196
    %v1198 = vrot.slane %v1189, %v1197
    %v1201 = vrcp.pop %v1194
    %v1202 = vmul.f32 %v1141, %v1201
    %v1203 = vmul.f32 %v1142, %v1201
    %v1204 = vrcp.pop %v1198
    %v1205 = vmul.f32 %v1143, %v1204
    %v1206 = vmul.f32 %v1144, %v1204
    %1211 = vset.pattern.permute.xlu0 0
    %1212 = vperm.xlu0 %1211, %v1202
    %v1213 = vpop.permute.xlu0 %1212
    %1214 = vset.pattern.permute.xlu0 0
    %1215 = vperm.xlu0 %1214, %v1203
    %v1216 = vpop.permute.xlu0 %1215
    %1217 = vset.pattern.permute.xlu0 0
    %1218 = vperm.xlu0 %1217, %v1205
    %v1219 = vpop.permute.xlu0 %1218
    %1220 = vset.pattern.permute.xlu0 0
    %1221 = vperm.xlu0 %1220, %v1206
    %v1222 = vpop.permute.xlu0 %1221
    %v1223 = vlaneseq
    %v1224 = vshrl.u32 %v1223, 7
    %v1225 = vsub.s32 %v1162, %v1224
    %v1226 = vrot.slane %v1213, %v1225
    %v1227 = vlaneseq
    %v1228 = vshrl.u32 %v1227, 7
    %v1229 = vsub.s32 %v1167, %v1228
    %v1230 = vrot.slane %v1216, %v1229
    %v1231 = vsel %vm1172, %v1230, %v1226
    %v1232 = vlaneseq
    %v1233 = vshrl.u32 %v1232, 7
    %v1234 = vsub.s32 %v1162, %v1233
    %v1235 = vrot.slane %v1219, %v1234
    %v1236 = vlaneseq
    %v1237 = vshrl.u32 %v1236, 7
    %v1238 = vsub.s32 %v1167, %v1237
    %v1239 = vrot.slane %v1222, %v1238
    %v1240 = vsel %vm1172, %v1239, %v1235
    %v1241 = vsel %vm1183, %v1240, %v1231
    %1243 = vst.msk [vmem:[#allocation6] sm:$0x3] %vm1186, %v1241
    %v1244 = vunpack.c.l.bf16 %v780
    %v1245 = vunpack.c.l.bf16 %v781
    %v1246 = vunpack.c.l.bf16 %v782
    %v1247 = vunpack.c.l.bf16 %v783
    %v1252 = vmul.f32 %v1213, %v1244
    %v1253 = vmul.f32 %v1216, %v1245
    %v1254 = vmul.f32 %v1219, %v1246
    %v1255 = vmul.f32 %v1222, %v1247
    %v1256 = vadd.f32 %v1252, %v1253
    %v1257 = vrot.slane %v1256, 4
    %v1258 = vadd.f32 %v1256, %v1257
    %v1259 = vrot.slane %v1258, 2
    %v1260 = vadd.f32 %v1258, %v1259
    %v1261 = vrot.slane %v1260, 1
    %v1262 = vadd.f32 %v1260, %v1261
    %v1263 = vadd.f32 %v1254, %v1255
    %v1264 = vrot.slane %v1263, 4
    %v1265 = vadd.f32 %v1263, %v1264
    %v1266 = vrot.slane %v1265, 2
    %v1267 = vadd.f32 %v1265, %v1266
    %v1268 = vrot.slane %v1267, 1
    %v1269 = vadd.f32 %v1267, %v1268
    %v1272 = vsel %vm1183, %v1269, %v1262
    %1274 = vst [vmem:[#allocation4] sm:$0x3] %v1272
    // Predicated region
    $region66: #{attention_rnn_cell_forward.1} parent=1 // pred_check
      _
    $region67: #{attention_rnn_cell_forward.1} parent=1 // pred_check_branch
      %1276 = sbr.rel (0) target = $region69
    $region68: #{attention_rnn_cell_forward.1} parent=1 // pred_region
      %s1278 = ssub.s32 32, 32
      %1279 = vsyncadd [#allocation3], %s1278
      %s1281 = sshll.u32 [#allocation2], 4
      %s1282 = int_to_ptr.vmem [resolvable:$true] %s1281
      %1284 = dma.vmem_to_hbm [thread:$0]  %s1282, 32, %s16, [#allocation3]
    $region69: #{attention_rnn_cell_forward.1} parent=1 // pred_fallthru
      _
    // Predicated region
    $region70: #{attention_rnn_cell_forward.1} parent=1 // pred_check
      _
    $region71: #{attention_rnn_cell_forward.1} parent=1 // pred_check_branch
      %1286 = sbr.rel (0) target = $region73
    $region72: #{attention_rnn_cell_forward.1} parent=1 // pred_region
      %s1288 = ssub.s32 32, 32
      %1289 = vsyncadd [#allocation5], %s1288
      %s1291 = sshll.u32 [#allocation4], 4
      %s1292 = int_to_ptr.vmem [resolvable:$true] %s1291
      %1294 = dma.vmem_to_hbm [thread:$0]  %s1292, 32, %s17, [#allocation5]
    $region73: #{attention_rnn_cell_forward.1} parent=1 // pred_fallthru
      _
    // Predicated region
    $region74: #{attention_rnn_cell_forward.1} parent=1 // pred_check
      _
    $region75: #{attention_rnn_cell_forward.1} parent=1 // pred_check_branch
      %1296 = sbr.rel (0) target = $region77
    $region76: #{attention_rnn_cell_forward.1} parent=1 // pred_region
      %s1298 = ssub.s32 32, 32
      %1299 = vsyncadd [#allocation5], %s1298
      %s1301 = sshll.u32 [#allocation6], 4
      %s1302 = int_to_ptr.vmem [resolvable:$true] %s1301
      %1304 = dma.vmem_to_hbm [thread:$0]  %s1302, 32, %s18, [#allocation5]
    $region77: #{attention_rnn_cell_forward.1} parent=1 // pred_fallthru
      _
    // Predicated region
    $region78: #{attention_rnn_cell_forward.1} parent=1 // pred_check
      _
    $region79: #{attention_rnn_cell_forward.1} parent=1 // pred_check_branch
      %1306 = sbr.rel (0) target = $region81
    $region80: #{attention_rnn_cell_forward.1} parent=1 // pred_region
      %1307 = dma.done [#allocation3], 32
    $region81: #{attention_rnn_cell_forward.1} parent=1 // pred_fallthru
      _
    // Predicated region
    $region82: #{attention_rnn_cell_forward.1} parent=1 // pred_check
      _
    $region83: #{attention_rnn_cell_forward.1} parent=1 // pred_check_branch
      %1309 = sbr.rel (0) target = $region85
    $region84: #{attention_rnn_cell_forward.1} parent=1 // pred_region
      %1310 = dma.done [#allocation5], 32
    $region85: #{attention_rnn_cell_forward.1} parent=1 // pred_fallthru
      _
    // Predicated region
    $region86: #{attention_rnn_cell_forward.1} parent=1 // pred_check
      _
    $region87: #{attention_rnn_cell_forward.1} parent=1 // pred_check_branch
      %1312 = sbr.rel (0) target = $region89
    $region88: #{attention_rnn_cell_forward.1} parent=1 // pred_region
      %1313 = dma.done [#allocation5], 32
    $region89: #{attention_rnn_cell_forward.1} parent=1 // pred_fallthru
      _
    %1314 = vsyncpa [#allocation3], 1
    %1315 = vsyncpa [#allocation5], 1

</llo_original>
